<compile_context>
chip_gen: v6e
topology: v6e:2x2x1
jax: 0.10.0
libtpu: 0.0.40
codegen_flags: <defaults>
</compile_context>

<pallas_src>
import functools
import math

import jax
import jax.numpy as jnp
from jax import lax
from jax.experimental import pallas as pl
from jax.experimental.pallas import tpu as pltpu

EPS = 1e-5


def _basic_block_kernel(
    xc_ref,      # (s*C_in,  B_blk*P1)    phase-split, SAME-padded input (f32)
    mask_ref,    # (s*C_in,  B_blk*P1)    1 inside the signal, 0 on pad columns
    xid_ref,     # (s*C_out, B_blk*L_out) identity phases, channels pre-padded
    w1_ref,      # (C_out, K*C_in)  bf16
    w2_ref,      # (C_out, K*C_out) bf16
    s1_ref, t1_ref,   # (s*C_in, 1)  fused bn1 scale/shift (phase-tiled)
    s2_ref, t2_ref,   # (C_out, 1)   fused bn2 scale/shift (conv1 bias folded in)
    b2_ref,           # (C_out, 1)   conv2 bias
    out_ref,          # (C_out, B_blk*L_out)
    rhs1_scr,         # (K*C_in,  B_blk*L_out) bf16 im2col for conv1
    rhs2_scr,         # (K*C_out, B_blk*L_out) bf16 im2col for conv2
    *,
    C_in, C_out, K, stride, L_out, P1, B_blk, pad_left2, apply_act1,
):
    cdt = rhs1_scr.dtype

    # ---- bn1 + relu1 (dropout = identity in eval); re-zero SAME-pad columns ----
    h = xc_ref[...]
    if apply_act1:
        h = jnp.maximum(h * s1_ref[...] + t1_ref[...], 0.0) * mask_ref[...]

    # ---- conv1: build im2col RHS with unit-stride slices, one MXU matmul ----
    for k in range(K):
        r, q0 = k % stride, k // stride
        blk = h[r * C_in:(r + 1) * C_in, :]
        for n in range(B_blk):
            rhs1_scr[k * C_in:(k + 1) * C_in, n * L_out:(n + 1) * L_out] = (
                blk[:, n * P1 + q0:n * P1 + q0 + L_out].astype(cdt))
    acc1 = jnp.dot(w1_ref[...], rhs1_scr[...], preferred_element_type=jnp.float32)

    # ---- bn2 (+ folded conv1 bias) + relu2 ----
    h2 = jnp.maximum(acc1 * s2_ref[...] + t2_ref[...], 0.0)

    # ---- conv2 (stride 1, SAME): im2col with static zero edge columns ----
    for k in range(K):
        sh = k - pad_left2
        lo = min(max(0, -sh), L_out)
        hi = min(max(0, sh), L_out)
        w = L_out - lo - hi
        rows = slice(k * C_out, (k + 1) * C_out)
        for n in range(B_blk):
            c0 = n * L_out
            if lo:
                rhs2_scr[rows, c0:c0 + lo] = jnp.zeros((C_out, lo), cdt)
            if hi:
                rhs2_scr[rows, c0 + L_out - hi:c0 + L_out] = jnp.zeros((C_out, hi), cdt)
            if w > 0:
                rhs2_scr[rows, c0 + lo:c0 + lo + w] = (
                    h2[:, c0 + lo + sh:c0 + lo + sh + w].astype(cdt))
    acc2 = jnp.dot(w2_ref[...], rhs2_scr[...], preferred_element_type=jnp.float32)
    acc2 = acc2 + b2_ref[...]

    # ---- identity: SAME max-pool == elementwise max over the phase blocks ----
    ident = xid_ref[0:C_out, :]
    for j in range(1, stride):
        ident = jnp.maximum(ident, xid_ref[j * C_out:(j + 1) * C_out, :])

    out_ref[...] = (acc2 + ident).astype(out_ref.dtype)


def basic_block_forward(x, params, *, kernel_size, stride, groups, downsample,
                        use_bn, use_do, is_first_block):
    """Forward pass of BasicBlock (eval mode) via a single Pallas TPU kernel."""
    del use_do                      # dropout == identity in eval mode
    assert groups == 1, "TODO(synk): grouped conv not implemented"
    f32, bf16 = jnp.float32, jnp.bfloat16
    N, C_in, L = x.shape
    C_out = params["conv1_w"].shape[0]
    assert C_out >= C_in, "TODO(synk): C_out < C_in channel-crop not implemented"
    K = kernel_size
    s = stride if downsample else 1

    # SAME-padding arithmetic (mirrors MyConv1dPadSame / MyMaxPool1dPadSame).
    L_out = -(-L // s)
    p1 = max(0, (L_out - 1) * s + K - L)
    pad_left1 = p1 // 2
    P1 = L_out + (K - 1) // s            # per-phase length needed by conv1's taps
    pad_left2 = (K - 1) // 2             # conv2: stride 1 SAME

    # Batch tile: fold batch onto lanes so tiles are lane-dense (>=128 lanes).
    B_blk = min(N, max(1, -(-128 // L_out)))
    if B_blk < N:
        # keep tiled lane widths 128-aligned; otherwise fall back to one block
        f = max(128 // math.gcd(128, L_out), 128 // math.gcd(128, P1))
        B_blk = -(-B_blk // f) * f
        if B_blk >= N:
            B_blk = N
    N_pad = -(-N // B_blk) * B_blk
    n_blk = N_pad // B_blk

    xb = jnp.pad(x.astype(f32), ((0, N_pad - N), (0, 0), (0, 0)))

    # ---- conv1 input: SAME zero-pad, then polyphase split; lanes are batch-major ----
    W1 = s * P1
    xp = jnp.pad(xb, ((0, 0), (0, 0), (pad_left1, W1 - pad_left1 - L)))
    xc = (xp.reshape(N_pad, C_in, P1, s)
            .transpose(3, 1, 0, 2)               # (s, C_in, N_pad, P1)
            .reshape(s * C_in, N_pad * P1))

    # 0/1 validity mask in the same layout, one batch-block wide (constant input).
    pos = jnp.arange(P1)[None, :] * s + jnp.arange(s)[:, None]          # (s, P1)
    valid = ((pos >= pad_left1) & (pos < pad_left1 + L)).astype(f32)
    mask = jnp.tile(jnp.repeat(valid, C_in, axis=0), (1, B_blk))        # (s*C_in, B_blk*P1)

    # ---- identity input: max-pool phases of raw x, channels pre-padded to C_out ----
    ch1 = (C_out - C_in) // 2
    ch2 = C_out - C_in - ch1
    pool_pad_left = (s - 1) // 2
    Wp = s * L_out
    xq = jnp.pad(xb, ((0, 0), (0, 0),
                      (pool_pad_left, max(0, Wp - pool_pad_left - L))))[:, :, :Wp]
    xid = (xq.reshape(N_pad, C_in, L_out, s)
             .transpose(3, 1, 0, 2))             # (s, C_in, N_pad, L_out)
    xid = jnp.pad(xid, ((0, 0), (ch1, ch2), (0, 0), (0, 0)))
    xid = xid.reshape(s * C_out, N_pad * L_out)

    # ---- fused BN scale/shift, folded conv1 bias, reshaped bf16 weights ----
    def fused_bn(pfx, C):
        if use_bn:
            sc = params[pfx + "_gamma"].astype(f32) * lax.rsqrt(
                params[pfx + "_var"].astype(f32) + EPS)
            sh = params[pfx + "_beta"].astype(f32) - params[pfx + "_mean"].astype(f32) * sc
        else:
            sc, sh = jnp.ones((C,), f32), jnp.zeros((C,), f32)
        return sc, sh

    sc1, sh1 = fused_bn("bn1", C_in)
    s1p = jnp.tile(sc1.reshape(1, C_in), (s, 1)).reshape(s * C_in, 1)
    t1p = jnp.tile(sh1.reshape(1, C_in), (s, 1)).reshape(s * C_in, 1)
    sc2, sh2 = fused_bn("bn2", C_out)
    s2 = sc2.reshape(C_out, 1)
    t2 = (params["conv1_b"].astype(f32) * sc2 + sh2).reshape(C_out, 1)
    b2c = params["conv2_b"].astype(f32).reshape(C_out, 1)

    w1r = jnp.transpose(params["conv1_w"], (0, 2, 1)).reshape(C_out, K * C_in).astype(bf16)
    w2r = jnp.transpose(params["conv2_w"], (0, 2, 1)).reshape(C_out, K * C_out).astype(bf16)

    kernel = functools.partial(
        _basic_block_kernel,
        C_in=C_in, C_out=C_out, K=K, stride=s, L_out=L_out, P1=P1, B_blk=B_blk,
        pad_left2=pad_left2, apply_act1=not is_first_block)

    in_specs = [
        pl.BlockSpec((s * C_in, B_blk * P1), lambda b: (0, b)),        # xc
        pl.BlockSpec((s * C_in, B_blk * P1), lambda b: (0, 0)),        # mask (constant)
        pl.BlockSpec((s * C_out, B_blk * L_out), lambda b: (0, b)),    # xid
        pl.BlockSpec((C_out, K * C_in), lambda b: (0, 0)),             # w1r
        pl.BlockSpec((C_out, K * C_out), lambda b: (0, 0)),            # w2r
        pl.BlockSpec((s * C_in, 1), lambda b: (0, 0)),                 # s1p
        pl.BlockSpec((s * C_in, 1), lambda b: (0, 0)),                 # t1p
        pl.BlockSpec((C_out, 1), lambda b: (0, 0)),                    # s2
        pl.BlockSpec((C_out, 1), lambda b: (0, 0)),                    # t2
        pl.BlockSpec((C_out, 1), lambda b: (0, 0)),                    # b2c
    ]
    out_specs = pl.BlockSpec((C_out, B_blk * L_out), lambda b: (0, b))

    out = pl.pallas_call(
        kernel,
        out_shape=jax.ShapeDtypeStruct((C_out, N_pad * L_out), f32),
        grid_spec=pltpu.PrefetchScalarGridSpec(
            num_scalar_prefetch=0,
            grid=(n_blk,),
            in_specs=in_specs,
            out_specs=out_specs,
            scratch_shapes=[pltpu.VMEM((K * C_in, B_blk * L_out), bf16),
                            pltpu.VMEM((K * C_out, B_blk * L_out), bf16)],
        ),
        compiler_params=pltpu.CompilerParams(dimension_semantics=("parallel",)),
    )(xc, mask, xid, w1r, w2r, s1p, t1p, s2, t2, b2c)

    return out.reshape(C_out, N_pad, L_out).transpose(1, 0, 2)[:N]


# ---------------- pure-JAX reference (eval-mode semantics) ----------------
def ref_basic_block(x, params, *, kernel_size, stride, groups, downsample,
                    use_bn, use_do, is_first_block):
    del groups, use_do
    K = kernel_size
    eff_stride = stride if downsample else 1

    def bn(h, pfx):
        g, b, m, v = (params[pfx + s] for s in ("_gamma", "_beta", "_mean", "_var"))
        return ((h - m[None, :, None]) * lax.rsqrt(v[None, :, None] + EPS)
                * g[None, :, None] + b[None, :, None])

    def conv_same(h, w, b, s):
        L = h.shape[-1]
        out_dim = -(-L // s)
        p = max(0, (out_dim - 1) * s + K - L)
        hp = jnp.pad(h, ((0, 0), (0, 0), (p // 2, p - p // 2)))
        y = lax.conv_general_dilated(hp, w, (s,), "VALID",
                                     dimension_numbers=("NCH", "OIH", "NCH"),
                                     precision=lax.Precision.HIGHEST)
        return y + b[None, :, None]

    def maxpool_same(h, k):
        if k == 1:
            return h
        Nb, Cb, Lb = h.shape
        p = k - 1
        hp = jnp.pad(h, ((0, 0), (0, 0), (p // 2, p - p // 2)))
        n_out = (hp.shape[-1] - k) // k + 1
        hp = hp[:, :, : n_out * k].reshape(Nb, Cb, n_out, k)
        return hp.max(axis=-1)

    identity = x
    out = x
    if not is_first_block:
        if use_bn:
            out = bn(out, "bn1")
        out = jnp.maximum(out, 0.0)
    out = conv_same(out, params["conv1_w"], params["conv1_b"], eff_stride)
    if use_bn:
        out = bn(out, "bn2")
    out = jnp.maximum(out, 0.0)
    out = conv_same(out, params["conv2_w"], params["conv2_b"], 1)
    if downsample:
        identity = maxpool_same(identity, eff_stride)
    C_in, C_out = x.shape[1], out.shape[1]
    if C_out != C_in:
        ch1 = (C_out - C_in) // 2
        ch2 = C_out - C_in - ch1
        identity = jnp.pad(identity, ((0, 0), (ch1, ch2), (0, 0)))
    return out + identity


if __name__ == "__main__":
    N, C_in, C_out, L = 2, 4, 8, 128
    K, stride, groups = 3, 2, 1
    downsample, use_bn, use_do, is_first_block = True, True, False, False

    key = jax.random.PRNGKey(0)
    ks = jax.random.split(key, 12)
    f32 = jnp.float32
    params = {
        "bn1_gamma": 1.0 + 0.1 * jax.random.normal(ks[0], (C_in,), f32),
        "bn1_beta":  0.1 * jax.random.normal(ks[1], (C_in,), f32),
        "bn1_mean":  0.1 * jax.random.normal(ks[2], (C_in,), f32),
        "bn1_var":   jax.random.uniform(ks[3], (C_in,), f32, 0.5, 1.5),
        "conv1_w":   0.1 * jax.random.normal(ks[4], (C_out, C_in, K), f32),
        "conv1_b":   0.1 * jax.random.normal(ks[5], (C_out,), f32),
        "bn2_gamma": 1.0 + 0.1 * jax.random.normal(ks[6], (C_out,), f32),
        "bn2_beta":  0.1 * jax.random.normal(ks[7], (C_out,), f32),
        "bn2_mean":  0.1 * jax.random.normal(ks[8], (C_out,), f32),
        "bn2_var":   jax.random.uniform(ks[9], (C_out,), f32, 0.5, 1.5),
        "conv2_w":   0.1 * jax.random.normal(ks[10], (C_out, C_out, K), f32),
        "conv2_b":   0.1 * jax.random.normal(ks[11], (C_out,), f32),
    }
    x = jax.random.normal(jax.random.PRNGKey(42), (N, C_in, L), f32)

    cfg = dict(kernel_size=K, stride=stride, groups=groups, downsample=downsample,
               use_bn=use_bn, use_do=use_do, is_first_block=is_first_block)

    out = basic_block_forward(x, params, **cfg)
    out = jax.block_until_ready(out)

    ref = ref_basic_block(x, params, **cfg)
    assert out.shape == ref.shape, (out.shape, ref.shape)
    max_err = float(jnp.max(jnp.abs(out - ref)))
    # bf16 MXU operands with f32 accumulation -> small mixed-precision deviation.
    assert max_err < 3e-2, f"max abs err too large: {max_err}"

    print("KERNEL_OK")
</pallas_src>

<mosaic_0001>
module attributes {stable_mosaic.version = 11 : i64} {
  func.func @_basic_block_kernel(%arg0: i32, %arg1: memref<8x130xf32, #tpu.memory_space<vmem>>, %arg2: memref<8x130xf32, #tpu.memory_space<vmem>>, %arg3: memref<16x128xf32, #tpu.memory_space<vmem>>, %arg4: memref<8x12xbf16, #tpu.memory_space<vmem>>, %arg5: memref<8x24xbf16, #tpu.memory_space<vmem>>, %arg6: memref<8x1xf32, #tpu.memory_space<vmem>>, %arg7: memref<8x1xf32, #tpu.memory_space<vmem>>, %arg8: memref<8x1xf32, #tpu.memory_space<vmem>>, %arg9: memref<8x1xf32, #tpu.memory_space<vmem>>, %arg10: memref<8x1xf32, #tpu.memory_space<vmem>>, %arg11: memref<8x128xf32, #tpu.memory_space<vmem>>, %arg12: memref<12x128xbf16, #tpu.memory_space<vmem>>, %arg13: memref<24x128xbf16, #tpu.memory_space<vmem>>) attributes {dimension_semantics = [#tpu.dimension_semantics<parallel>], iteration_bounds = array<i64: 1>, scalar_prefetch = 0 : i64, scratch_operands = 2 : i64, tpu.core_type = #tpu.core_type<tc>, window_params = [{transform_indices = @transform_0, window_bounds = array<i64: 8, 130>}, {pipeline_mode = #tpu.pipeline_mode<synchronous>, transform_indices = @transform_1, window_bounds = array<i64: 8, 130>}, {transform_indices = @transform_2, window_bounds = array<i64: 16, 128>}, {pipeline_mode = #tpu.pipeline_mode<synchronous>, transform_indices = @transform_3, window_bounds = array<i64: 8, 12>}, {pipeline_mode = #tpu.pipeline_mode<synchronous>, transform_indices = @transform_4, window_bounds = array<i64: 8, 24>}, {pipeline_mode = #tpu.pipeline_mode<synchronous>, transform_indices = @transform_5, window_bounds = array<i64: 8, 1>}, {pipeline_mode = #tpu.pipeline_mode<synchronous>, transform_indices = @transform_6, window_bounds = array<i64: 8, 1>}, {pipeline_mode = #tpu.pipeline_mode<synchronous>, transform_indices = @transform_7, window_bounds = array<i64: 8, 1>}, {pipeline_mode = #tpu.pipeline_mode<synchronous>, transform_indices = @transform_8, window_bounds = array<i64: 8, 1>}, {pipeline_mode = #tpu.pipeline_mode<synchronous>, transform_indices = @transform_9, window_bounds = array<i64: 8, 1>}, {transform_indices = @transform_10, window_bounds = array<i64: 8, 128>}]} {
    %c0 = arith.constant 0 : index
    %c0_0 = arith.constant 0 : index
    %0 = vector.load %arg1[%c0, %c0_0] : memref<8x130xf32, #tpu.memory_space<vmem>>, vector<8x130xf32>
    %c0_1 = arith.constant 0 : index
    %c0_2 = arith.constant 0 : index
    %1 = vector.load %arg6[%c0_1, %c0_2] : memref<8x1xf32, #tpu.memory_space<vmem>>, vector<8x1xf32>
    %2 = vector.broadcast %1 : vector<8x1xf32> to vector<8x130xf32>
    %3 = arith.mulf %0, %2 : vector<8x130xf32>
    %c0_3 = arith.constant 0 : index
    %c0_4 = arith.constant 0 : index
    %4 = vector.load %arg7[%c0_3, %c0_4] : memref<8x1xf32, #tpu.memory_space<vmem>>, vector<8x1xf32>
    %5 = vector.broadcast %4 : vector<8x1xf32> to vector<8x130xf32>
    %6 = arith.addf %3, %5 : vector<8x130xf32>
    %cst = arith.constant 0.000000e+00 : f32
    %7 = vector.broadcast %cst : f32 to vector<8x130xf32>
    %8 = arith.maximumf %6, %7 : vector<8x130xf32>
    %c0_5 = arith.constant 0 : index
    %c0_6 = arith.constant 0 : index
    %9 = vector.load %arg2[%c0_5, %c0_6] : memref<8x130xf32, #tpu.memory_space<vmem>>, vector<8x130xf32>
    %10 = arith.mulf %8, %9 : vector<8x130xf32>
    %11 = vector.extract_strided_slice %10 {offsets = [0, 0], sizes = [4, 130], strides = [1, 1]} : vector<8x130xf32> to vector<4x130xf32>
    %12 = vector.extract_strided_slice %11 {offsets = [0, 0], sizes = [4, 64], strides = [1, 1]} : vector<4x130xf32> to vector<4x64xf32>
    %13 = arith.truncf %12 : vector<4x64xf32> to vector<4x64xbf16>
    %c0_7 = arith.constant 0 : index
    %c0_8 = arith.constant 0 : index
    %14 = vector.load %arg12[%c0_7, %c0_8] : memref<12x128xbf16, #tpu.memory_space<vmem>>, vector<4x64xbf16>
    tpu.vector_store %arg12[%c0_7, %c0_8], %13 {strides = array<i32>} : memref<12x128xbf16, #tpu.memory_space<vmem>>, vector<4x64xbf16>,
    %15 = vector.extract_strided_slice %11 {offsets = [0, 65], sizes = [4, 64], strides = [1, 1]} : vector<4x130xf32> to vector<4x64xf32>
    %16 = arith.truncf %15 : vector<4x64xf32> to vector<4x64xbf16>
    %c0_9 = arith.constant 0 : index
    %c64 = arith.constant 64 : index
    %17 = vector.load %arg12[%c0_9, %c64] : memref<12x128xbf16, #tpu.memory_space<vmem>>, vector<4x64xbf16>
    tpu.vector_store %arg12[%c0_9, %c64], %16 {strides = array<i32>} : memref<12x128xbf16, #tpu.memory_space<vmem>>, vector<4x64xbf16>,
    %18 = vector.extract_strided_slice %10 {offsets = [4, 0], sizes = [4, 130], strides = [1, 1]} : vector<8x130xf32> to vector<4x130xf32>
    %19 = vector.extract_strided_slice %18 {offsets = [0, 0], sizes = [4, 64], strides = [1, 1]} : vector<4x130xf32> to vector<4x64xf32>
    %20 = arith.truncf %19 : vector<4x64xf32> to vector<4x64xbf16>
    %c4 = arith.constant 4 : index
    %c0_10 = arith.constant 0 : index
    %21 = vector.load %arg12[%c4, %c0_10] : memref<12x128xbf16, #tpu.memory_space<vmem>>, vector<4x64xbf16>
    tpu.vector_store %arg12[%c4, %c0_10], %20 {strides = array<i32>} : memref<12x128xbf16, #tpu.memory_space<vmem>>, vector<4x64xbf16>,
    %22 = vector.extract_strided_slice %18 {offsets = [0, 65], sizes = [4, 64], strides = [1, 1]} : vector<4x130xf32> to vector<4x64xf32>
    %23 = arith.truncf %22 : vector<4x64xf32> to vector<4x64xbf16>
    %c4_11 = arith.constant 4 : index
    %c64_12 = arith.constant 64 : index
    %24 = vector.load %arg12[%c4_11, %c64_12] : memref<12x128xbf16, #tpu.memory_space<vmem>>, vector<4x64xbf16>
    tpu.vector_store %arg12[%c4_11, %c64_12], %23 {strides = array<i32>} : memref<12x128xbf16, #tpu.memory_space<vmem>>, vector<4x64xbf16>,
    %25 = vector.extract_strided_slice %10 {offsets = [0, 0], sizes = [4, 130], strides = [1, 1]} : vector<8x130xf32> to vector<4x130xf32>
    %26 = vector.extract_strided_slice %25 {offsets = [0, 1], sizes = [4, 64], strides = [1, 1]} : vector<4x130xf32> to vector<4x64xf32>
    %27 = arith.truncf %26 : vector<4x64xf32> to vector<4x64xbf16>
    %c8 = arith.constant 8 : index
    %c0_13 = arith.constant 0 : index
    %28 = vector.load %arg12[%c8, %c0_13] : memref<12x128xbf16, #tpu.memory_space<vmem>>, vector<4x64xbf16>
    tpu.vector_store %arg12[%c8, %c0_13], %27 {strides = array<i32>} : memref<12x128xbf16, #tpu.memory_space<vmem>>, vector<4x64xbf16>,
    %29 = vector.extract_strided_slice %25 {offsets = [0, 66], sizes = [4, 64], strides = [1, 1]} : vector<4x130xf32> to vector<4x64xf32>
    %30 = arith.truncf %29 : vector<4x64xf32> to vector<4x64xbf16>
    %c8_14 = arith.constant 8 : index
    %c64_15 = arith.constant 64 : index
    %31 = vector.load %arg12[%c8_14, %c64_15] : memref<12x128xbf16, #tpu.memory_space<vmem>>, vector<4x64xbf16>
    tpu.vector_store %arg12[%c8_14, %c64_15], %30 {strides = array<i32>} : memref<12x128xbf16, #tpu.memory_space<vmem>>, vector<4x64xbf16>,
    %c0_16 = arith.constant 0 : index
    %c0_17 = arith.constant 0 : index
    %32 = vector.load %arg4[%c0_16, %c0_17] : memref<8x12xbf16, #tpu.memory_space<vmem>>, vector<8x12xbf16>
    %c0_18 = arith.constant 0 : index
    %c0_19 = arith.constant 0 : index
    %33 = vector.load %arg12[%c0_18, %c0_19] : memref<12x128xbf16, #tpu.memory_space<vmem>>, vector<12x128xbf16>
    %cst_20 = arith.constant dense<0.000000e+00> : vector<8x128xf32>
    %34 = tpu.matmul %32, %33, %cst_20 {dimension_numbers = #tpu.dot_dimension_numbers<[1], [0], [0], [1], [0, 0, 1, 1], [], []>} : vector<8x12xbf16>, vector<12x128xbf16>, vector<8x128xf32> -> vector<8x128xf32>
    %c0_21 = arith.constant 0 : index
    %c0_22 = arith.constant 0 : index
    %35 = vector.load %arg8[%c0_21, %c0_22] : memref<8x1xf32, #tpu.memory_space<vmem>>, vector<8x1xf32>
    %36 = vector.broadcast %35 : vector<8x1xf32> to vector<8x128xf32>
    %37 = arith.mulf %34, %36 : vector<8x128xf32>
    %c0_23 = arith.constant 0 : index
    %c0_24 = arith.constant 0 : index
    %38 = vector.load %arg9[%c0_23, %c0_24] : memref<8x1xf32, #tpu.memory_space<vmem>>, vector<8x1xf32>
    %39 = vector.broadcast %38 : vector<8x1xf32> to vector<8x128xf32>
    %40 = arith.addf %37, %39 : vector<8x128xf32>
    %cst_25 = arith.constant 0.000000e+00 : f32
    %41 = vector.broadcast %cst_25 : f32 to vector<8x128xf32>
    %42 = arith.maximumf %40, %41 : vector<8x128xf32>
    %cst_26 = arith.constant 0.000000e+00 : bf16
    %43 = vector.broadcast %cst_26 : bf16 to vector<8x1xbf16>
    %c0_27 = arith.constant 0 : index
    %c0_28 = arith.constant 0 : index
    %44 = vector.load %arg13[%c0_27, %c0_28] : memref<24x128xbf16, #tpu.memory_space<vmem>>, vector<8x1xbf16>
    tpu.vector_store %arg13[%c0_27, %c0_28], %43 {strides = array<i32>} : memref<24x128xbf16, #tpu.memory_space<vmem>>, vector<8x1xbf16>,
    %45 = vector.extract_strided_slice %42 {offsets = [0, 0], sizes = [8, 63], strides = [1, 1]} : vector<8x128xf32> to vector<8x63xf32>
    %46 = arith.truncf %45 : vector<8x63xf32> to vector<8x63xbf16>
    %c0_29 = arith.constant 0 : index
    %c1 = arith.constant 1 : index
    %47 = vector.load %arg13[%c0_29, %c1] : memref<24x128xbf16, #tpu.memory_space<vmem>>, vector<8x63xbf16>
    tpu.vector_store %arg13[%c0_29, %c1], %46 {strides = array<i32>} : memref<24x128xbf16, #tpu.memory_space<vmem>>, vector<8x63xbf16>,
    %cst_30 = arith.constant 0.000000e+00 : bf16
    %48 = vector.broadcast %cst_30 : bf16 to vector<8x1xbf16>
    %c0_31 = arith.constant 0 : index
    %c64_32 = arith.constant 64 : index
    %49 = vector.load %arg13[%c0_31, %c64_32] : memref<24x128xbf16, #tpu.memory_space<vmem>>, vector<8x1xbf16>
    tpu.vector_store %arg13[%c0_31, %c64_32], %48 {strides = array<i32>} : memref<24x128xbf16, #tpu.memory_space<vmem>>, vector<8x1xbf16>,
    %50 = vector.extract_strided_slice %42 {offsets = [0, 64], sizes = [8, 63], strides = [1, 1]} : vector<8x128xf32> to vector<8x63xf32>
    %51 = arith.truncf %50 : vector<8x63xf32> to vector<8x63xbf16>
    %c0_33 = arith.constant 0 : index
    %c65 = arith.constant 65 : index
    %52 = vector.load %arg13[%c0_33, %c65] : memref<24x128xbf16, #tpu.memory_space<vmem>>, vector<8x63xbf16>
    tpu.vector_store %arg13[%c0_33, %c65], %51 {strides = array<i32>} : memref<24x128xbf16, #tpu.memory_space<vmem>>, vector<8x63xbf16>,
    %53 = vector.extract_strided_slice %42 {offsets = [0, 0], sizes = [8, 64], strides = [1, 1]} : vector<8x128xf32> to vector<8x64xf32>
    %54 = arith.truncf %53 : vector<8x64xf32> to vector<8x64xbf16>
    %c8_34 = arith.constant 8 : index
    %c0_35 = arith.constant 0 : index
    %55 = vector.load %arg13[%c8_34, %c0_35] : memref<24x128xbf16, #tpu.memory_space<vmem>>, vector<8x64xbf16>
    tpu.vector_store %arg13[%c8_34, %c0_35], %54 {strides = array<i32>} : memref<24x128xbf16, #tpu.memory_space<vmem>>, vector<8x64xbf16>,
    %56 = vector.extract_strided_slice %42 {offsets = [0, 64], sizes = [8, 64], strides = [1, 1]} : vector<8x128xf32> to vector<8x64xf32>
    %57 = arith.truncf %56 : vector<8x64xf32> to vector<8x64xbf16>
    %c8_36 = arith.constant 8 : index
    %c64_37 = arith.constant 64 : index
    %58 = vector.load %arg13[%c8_36, %c64_37] : memref<24x128xbf16, #tpu.memory_space<vmem>>, vector<8x64xbf16>
    tpu.vector_store %arg13[%c8_36, %c64_37], %57 {strides = array<i32>} : memref<24x128xbf16, #tpu.memory_space<vmem>>, vector<8x64xbf16>,
    %cst_38 = arith.constant 0.000000e+00 : bf16
    %59 = vector.broadcast %cst_38 : bf16 to vector<8x1xbf16>
    %c16 = arith.constant 16 : index
    %c63 = arith.constant 63 : index
    %60 = vector.load %arg13[%c16, %c63] : memref<24x128xbf16, #tpu.memory_space<vmem>>, vector<8x1xbf16>
    tpu.vector_store %arg13[%c16, %c63], %59 {strides = array<i32>} : memref<24x128xbf16, #tpu.memory_space<vmem>>, vector<8x1xbf16>,
    %61 = vector.extract_strided_slice %42 {offsets = [0, 1], sizes = [8, 63], strides = [1, 1]} : vector<8x128xf32> to vector<8x63xf32>
    %62 = arith.truncf %61 : vector<8x63xf32> to vector<8x63xbf16>
    %c16_39 = arith.constant 16 : index
    %c0_40 = arith.constant 0 : index
    %63 = vector.load %arg13[%c16_39, %c0_40] : memref<24x128xbf16, #tpu.memory_space<vmem>>, vector<8x63xbf16>
    tpu.vector_store %arg13[%c16_39, %c0_40], %62 {strides = array<i32>} : memref<24x128xbf16, #tpu.memory_space<vmem>>, vector<8x63xbf16>,
    %cst_41 = arith.constant 0.000000e+00 : bf16
    %64 = vector.broadcast %cst_41 : bf16 to vector<8x1xbf16>
    %c16_42 = arith.constant 16 : index
    %c127 = arith.constant 127 : index
    %65 = vector.load %arg13[%c16_42, %c127] : memref<24x128xbf16, #tpu.memory_space<vmem>>, vector<8x1xbf16>
    tpu.vector_store %arg13[%c16_42, %c127], %64 {strides = array<i32>} : memref<24x128xbf16, #tpu.memory_space<vmem>>, vector<8x1xbf16>,
    %66 = vector.extract_strided_slice %42 {offsets = [0, 65], sizes = [8, 63], strides = [1, 1]} : vector<8x128xf32> to vector<8x63xf32>
    %67 = arith.truncf %66 : vector<8x63xf32> to vector<8x63xbf16>
    %c16_43 = arith.constant 16 : index
    %c64_44 = arith.constant 64 : index
    %68 = vector.load %arg13[%c16_43, %c64_44] : memref<24x128xbf16, #tpu.memory_space<vmem>>, vector<8x63xbf16>
    tpu.vector_store %arg13[%c16_43, %c64_44], %67 {strides = array<i32>} : memref<24x128xbf16, #tpu.memory_space<vmem>>, vector<8x63xbf16>,
    %c0_45 = arith.constant 0 : index
    %c0_46 = arith.constant 0 : index
    %69 = vector.load %arg5[%c0_45, %c0_46] : memref<8x24xbf16, #tpu.memory_space<vmem>>, vector<8x24xbf16>
    %c0_47 = arith.constant 0 : index
    %c0_48 = arith.constant 0 : index
    %70 = vector.load %arg13[%c0_47, %c0_48] : memref<24x128xbf16, #tpu.memory_space<vmem>>, vector<24x128xbf16>
    %cst_49 = arith.constant dense<0.000000e+00> : vector<8x128xf32>
    %71 = tpu.matmul %69, %70, %cst_49 {dimension_numbers = #tpu.dot_dimension_numbers<[1], [0], [0], [1], [0, 0, 1, 1], [], []>} : vector<8x24xbf16>, vector<24x128xbf16>, vector<8x128xf32> -> vector<8x128xf32>
    %c0_50 = arith.constant 0 : index
    %c0_51 = arith.constant 0 : index
    %72 = vector.load %arg10[%c0_50, %c0_51] : memref<8x1xf32, #tpu.memory_space<vmem>>, vector<8x1xf32>
    %73 = vector.broadcast %72 : vector<8x1xf32> to vector<8x128xf32>
    %74 = arith.addf %71, %73 : vector<8x128xf32>
    %c0_52 = arith.constant 0 : index
    %c0_53 = arith.constant 0 : index
    %75 = vector.load %arg3[%c0_52, %c0_53] : memref<16x128xf32, #tpu.memory_space<vmem>>, vector<8x128xf32>
    %c8_54 = arith.constant 8 : index
    %c0_55 = arith.constant 0 : index
    %76 = vector.load %arg3[%c8_54, %c0_55] : memref<16x128xf32, #tpu.memory_space<vmem>>, vector<8x128xf32>
    %77 = arith.maximumf %75, %76 : vector<8x128xf32>
    %78 = arith.addf %74, %77 : vector<8x128xf32>
    %c0_56 = arith.constant 0 : index
    %c0_57 = arith.constant 0 : index
    %79 = vector.load %arg11[%c0_56, %c0_57] : memref<8x128xf32, #tpu.memory_space<vmem>>, vector<8x128xf32>
    tpu.vector_store %arg11[%c0_56, %c0_57], %78 {strides = array<i32>} : memref<8x128xf32, #tpu.memory_space<vmem>>, vector<8x128xf32>,
    return
  }
  func.func @transform_0(%arg0: i32) -> (i32, i32) {
    %c0_i32 = arith.constant 0 : i32
    %c0_i32_0 = arith.constant 0 : i32
    return %c0_i32, %arg0 : i32, i32
  }
  func.func @transform_1(%arg0: i32) -> (i32, i32) {
    %c0_i32 = arith.constant 0 : i32
    %c0_i32_0 = arith.constant 0 : i32
    %c0_i32_1 = arith.constant 0 : i32
    return %c0_i32, %c0_i32_0 : i32, i32
  }
  func.func @transform_2(%arg0: i32) -> (i32, i32) {
    %c0_i32 = arith.constant 0 : i32
    %c0_i32_0 = arith.constant 0 : i32
    return %c0_i32, %arg0 : i32, i32
  }
  func.func @transform_3(%arg0: i32) -> (i32, i32) {
    %c0_i32 = arith.constant 0 : i32
    %c0_i32_0 = arith.constant 0 : i32
    %c0_i32_1 = arith.constant 0 : i32
    return %c0_i32, %c0_i32_0 : i32, i32
  }
  func.func @transform_4(%arg0: i32) -> (i32, i32) {
    %c0_i32 = arith.constant 0 : i32
    %c0_i32_0 = arith.constant 0 : i32
    %c0_i32_1 = arith.constant 0 : i32
    return %c0_i32, %c0_i32_0 : i32, i32
  }
  func.func @transform_5(%arg0: i32) -> (i32, i32) {
    %c0_i32 = arith.constant 0 : i32
    %c0_i32_0 = arith.constant 0 : i32
    %c0_i32_1 = arith.constant 0 : i32
    return %c0_i32, %c0_i32_0 : i32, i32
  }
  func.func @transform_6(%arg0: i32) -> (i32, i32) {
    %c0_i32 = arith.constant 0 : i32
    %c0_i32_0 = arith.constant 0 : i32
    %c0_i32_1 = arith.constant 0 : i32
    return %c0_i32, %c0_i32_0 : i32, i32
  }
  func.func @transform_7(%arg0: i32) -> (i32, i32) {
    %c0_i32 = arith.constant 0 : i32
    %c0_i32_0 = arith.constant 0 : i32
    %c0_i32_1 = arith.constant 0 : i32
    return %c0_i32, %c0_i32_0 : i32, i32
  }
  func.func @transform_8(%arg0: i32) -> (i32, i32) {
    %c0_i32 = arith.constant 0 : i32
    %c0_i32_0 = arith.constant 0 : i32
    %c0_i32_1 = arith.constant 0 : i32
    return %c0_i32, %c0_i32_0 : i32, i32
  }
  func.func @transform_9(%arg0: i32) -> (i32, i32) {
    %c0_i32 = arith.constant 0 : i32
    %c0_i32_0 = arith.constant 0 : i32
    %c0_i32_1 = arith.constant 0 : i32
    return %c0_i32, %c0_i32_0 : i32, i32
  }
  func.func @transform_10(%arg0: i32) -> (i32, i32) {
    %c0_i32 = arith.constant 0 : i32
    %c0_i32_0 = arith.constant 0 : i32
    return %c0_i32, %arg0 : i32, i32
  }
}

</mosaic_0001>

<llo_original>
// kernel: tpu_custom_call.1
$region0: #{tpu_custom_call.1}
  #allocation0 [shape = 'u32[]', space=smem, size = 0x4, offset = 0x4, fixed_abs, tag = 'smem constant byte address 0x4 - core index']
  #allocation1 [shape = 'u32[144,128]{1,0:T(1,128)}', space=vmem, size = 0x12000, scoped, tag = 'internal scratch']
  #allocation2 [shape = 'bf16[12,128]{1,0:T(8,128)(2,1)}', space=vmem, size = 0x1000, scoped, tag = 'scratch operand']
  #allocation3 [shape = 'bf16[24,128]{1,0:T(8,128)(2,1)}', space=vmem, size = 0x1800, scoped, tag = 'scratch operand']
  %s0 = inlined_call_operand.vmem [shape: f32[8,130], index: 0, kind: input, shape index: {}]
  %s1 = inlined_call_operand.vmem [shape: f32[8,130], index: 1, kind: input, shape index: {}]
  %s2 = inlined_call_operand.vmem [shape: f32[16,128], index: 2, kind: input, shape index: {}]
  %s3 = inlined_call_operand.hbm [shape: bf16[8,12], index: 3, kind: input, shape index: {}]
  %s4 = inlined_call_operand.vmem [shape: bf16[8,24], index: 4, kind: input, shape index: {}]
  %s5 = inlined_call_operand.vmem [shape: f32[8,1], index: 5, kind: input, shape index: {}]
  %s6 = inlined_call_operand.vmem [shape: f32[8,1], index: 6, kind: input, shape index: {}]
  %s7 = inlined_call_operand.vmem [shape: f32[8,1], index: 7, kind: input, shape index: {}]
  %s8 = inlined_call_operand.vmem [shape: f32[8,1], index: 8, kind: input, shape index: {}]
  %s9 = inlined_call_operand.vmem [shape: f32[8,1], index: 9, kind: input, shape index: {}]
  %s10 = inlined_call_operand.hbm [shape: f32[8,128], index: 10, kind: output, shape index: {}]
  %s11 = sld [smem:[#allocation0]]
  $region54: #{tpu_custom_call.1} parent=0
    _
  %s13 = ssub.s32 1, %s11
  %s14 = scalar_select 0, %s13, %s11
  $region1: #{tpu_custom_call.1} parent=0
    #allocation4 [shape = 'u8[2048]{0}', space=vmem, size = 0x800, scoped, tag = 'input window, operand 3, single buffered']
    #allocation5 [shape = 's32[1]{0}', space=sflag, size = 0x4, scoped, tag = 'scoped memory for tpu_custom_call.1']
    #allocation6 [shape = 's32[1]{0}', space=sflag, size = 0x4, scoped, tag = 'scoped memory for tpu_custom_call.1']
    #allocation7 [shape = 'u8[4096]{0}', space=vmem, size = 0x1000, scoped, tag = 'output window, operand 0, single buffered']
    %15 = vsyncpa [#allocation5], 0
    %16 = vsyncpa [#allocation6], 0
    // Predicated region
    $region2: #{tpu_custom_call.1} parent=1 // pred_check
      _
    $region3: #{tpu_custom_call.1} parent=1 // pred_check_branch
      %18 = sbr.rel (0) target = $region5
    $region4: #{tpu_custom_call.1} parent=1 // pred_region
      _
    $region5: #{tpu_custom_call.1} parent=1 // pred_fallthru
      _
    // Predicated region
    $region6: #{tpu_custom_call.1} parent=1 // pred_check
      _
    $region7: #{tpu_custom_call.1} parent=1 // pred_check_branch
      %20 = sbr.rel (0) target = $region9
    $region8: #{tpu_custom_call.1} parent=1 // pred_region
      _
    $region9: #{tpu_custom_call.1} parent=1 // pred_fallthru
      _
    // Predicated region
    $region10: #{tpu_custom_call.1} parent=1 // pred_check
      _
    $region11: #{tpu_custom_call.1} parent=1 // pred_check_branch
      %22 = sbr.rel (0) target = $region13
    $region12: #{tpu_custom_call.1} parent=1 // pred_region
      _
    $region13: #{tpu_custom_call.1} parent=1 // pred_fallthru
      _
    // Predicated region
    $region14: #{tpu_custom_call.1} parent=1 // pred_check
      _
    $region15: #{tpu_custom_call.1} parent=1 // pred_check_branch
      %24 = sbr.rel (0) target = $region17
    $region16: #{tpu_custom_call.1} parent=1 // pred_region
      %s26 = ssub.s32 64, 64
      %27 = vsyncadd [#allocation5], %s26
      %s29 = sshll.u32 [#allocation4], 4
      %s30 = int_to_ptr.vmem [resolvable:$true] %s29
      %32 = dma.hbm_to_vmem [thread:$0]  %s3, 64, %s30, [#allocation5]
    $region17: #{tpu_custom_call.1} parent=1 // pred_fallthru
      _
    // Predicated region
    $region18: #{tpu_custom_call.1} parent=1 // pred_check
      _
    $region19: #{tpu_custom_call.1} parent=1 // pred_check_branch
      %34 = sbr.rel (0) target = $region21
    $region20: #{tpu_custom_call.1} parent=1 // pred_region
      _
    $region21: #{tpu_custom_call.1} parent=1 // pred_fallthru
      _
    // Predicated region
    $region22: #{tpu_custom_call.1} parent=1 // pred_check
      _
    $region23: #{tpu_custom_call.1} parent=1 // pred_check_branch
      %36 = sbr.rel (0) target = $region25
    $region24: #{tpu_custom_call.1} parent=1 // pred_region
      _
    $region25: #{tpu_custom_call.1} parent=1 // pred_fallthru
      _
    // Predicated region
    $region26: #{tpu_custom_call.1} parent=1 // pred_check
      _
    $region27: #{tpu_custom_call.1} parent=1 // pred_check_branch
      %38 = sbr.rel (0) target = $region29
    $region28: #{tpu_custom_call.1} parent=1 // pred_region
      _
    $region29: #{tpu_custom_call.1} parent=1 // pred_fallthru
      _
    // Predicated region
    $region30: #{tpu_custom_call.1} parent=1 // pred_check
      _
    $region31: #{tpu_custom_call.1} parent=1 // pred_check_branch
      %40 = sbr.rel (0) target = $region33
    $region32: #{tpu_custom_call.1} parent=1 // pred_region
      _
    $region33: #{tpu_custom_call.1} parent=1 // pred_fallthru
      _
    // Predicated region
    $region34: #{tpu_custom_call.1} parent=1 // pred_check
      _
    $region35: #{tpu_custom_call.1} parent=1 // pred_check_branch
      %42 = sbr.rel (0) target = $region37
    $region36: #{tpu_custom_call.1} parent=1 // pred_region
      _
    $region37: #{tpu_custom_call.1} parent=1 // pred_fallthru
      _
    // Predicated region
    $region38: #{tpu_custom_call.1} parent=1 // pred_check
      _
    $region39: #{tpu_custom_call.1} parent=1 // pred_check_branch
      %44 = sbr.rel (0) target = $region41
    $region40: #{tpu_custom_call.1} parent=1 // pred_region
      _
    $region41: #{tpu_custom_call.1} parent=1 // pred_fallthru
      _
    // Predicated region
    $region42: #{tpu_custom_call.1} parent=1 // pred_check
      _
    $region43: #{tpu_custom_call.1} parent=1 // pred_check_branch
      %46 = sbr.rel (0) target = $region45
    $region44: #{tpu_custom_call.1} parent=1 // pred_region
      %47 = dma.done [#allocation5], 64
    $region45: #{tpu_custom_call.1} parent=1 // pred_fallthru
      _
    %v49 = vld [vmem:[%s0] sm:$0xff]
    %v50 = vld [vmem:[%s0 + $0x8] sm:$0xff]
    %v51 = vld [vmem:[%s5] sm:$0xff]
    %53 = vset.pattern.permute.xlu0 0
    %54 = vperm.xlu0 %53, %v51
    %v55 = vpop.permute.xlu0 %54
    %v57 = vmul.f32 %v49, %v55
    %v58 = vmul.f32 %v50, %v55
    %v59 = vld [vmem:[%s6] sm:$0xff]
    %61 = vset.pattern.permute.xlu0 0
    %62 = vperm.xlu0 %61, %v59
    %v63 = vpop.permute.xlu0 %62
    %v65 = vadd.f32 %v57, %v63
    %v66 = vadd.f32 %v58, %v63
    %v67 = vmax.f32 %v65, 0.0
    %v68 = vmax.f32 %v66, 0.0
    %v69 = vld [vmem:[%s1] sm:$0xff]
    %v70 = vld [vmem:[%s1 + $0x8] sm:$0xff]
    %v71 = vmul.f32 %v67, %v69
    %v72 = vmul.f32 %v68, %v70
    %v73 = vpack.c.bf16 %v71, %v71
    %vm74 = vcmask 517120
    %75 = vst.msk [vmem:[#allocation2] sm:$0x3] %vm74, %v73
    %v76 = vpack.c.bf16 %v72, %v72
    %v79 = vunpack.c.l.b16 %v73
    %v80 = vunpack.c.l.b16 %v76
    %v81 = vpack.c.b16 %v80, %v79
    %82 = vrot.lane.b32.xlu0 %v81, 127
    %v83 = vpop.permute.xlu0 %82
    %v84 = vrot.slane %v83, 4
    %vm85 = vcmask 1039360
    %v86 = vsel %vm85, %v83, %v84
    %vm88 = vcmask 1041920
    %89 = vst.msk [vmem:[#allocation2] sm:$0x3] %vm88, %v86
    %vm90 = vcmask 519170
    %91 = vst.msk [vmem:[#allocation2] sm:$0xc] %vm90, %v73
    %vm92 = vcmask 1043970
    %93 = vst.msk [vmem:[#allocation2] sm:$0xc] %vm92, %v86
    %v94 = vpack.c.b16 %v79, %v79
    %95 = vrot.lane.b32.xlu0 %v94, 127
    %v96 = vpop.permute.xlu0 %95
    %98 = vst.msk [vmem:[#allocation2 + $0x4] sm:$0x3] %vm74, %v96
    %99 = vrot.lane.b32.xlu0 %v81, 126
    %v100 = vpop.permute.xlu0 %99
    %v101 = vrot.slane %v100, 4
    %vm102 = vcmask 1031168
    %v103 = vsel %vm102, %v100, %v101
    %105 = vst.msk [vmem:[#allocation2 + $0x4] sm:$0x3] %vm88, %v103
    %v106 = vld [vmem:[#allocation4] sm:$0xf]
    %v107 = vld [vmem:[#allocation2] sm:$0xf]
    %v108 = vld [vmem:[#allocation2 + $0x4] sm:$0x3]
    %v111 = vunpack.c.l.b16 %v107
    %v112 = vunpack.c.l.b16 %v108
    %v113 = vpack.c.b16 %v112, %v111
    %vm114 = vcmask 97280
    %v116 = vsel %vm114, %v106, 0
    %vm118 = vcmask 1045504
    %v120 = vsel %vm118, %v113, 0
    %122 = vmatprep.subr.bf16.mxu0 0
    %123 = vmatpush1.bf16.msra.mxu0 0
    %124 = vmatprep.subr.bf16.mxu0 0
    %125 = vmatpush1.bf16.msra.mxu0 0
    %126 = vmatprep.subr.bf16.mxu0 0
    %127 = vmatpush1.bf16.msra.mxu0 0
    %128 = vmatprep.subr.bf16.mxu0 0
    %129 = vmatpush1.bf16.msra.mxu0 0
    %130 = vmatprep.subr.bf16.mxu0 0
    %131 = vmatpush1.bf16.msra.mxu0 0
    %132 = vmatprep.subr.bf16.mxu0 0
    %133 = vmatpush1.bf16.msra.mxu0 0
    %134 = vmatprep.subr.bf16.mxu0 0
    %135 = vmatpush1.bf16.msra.mxu0 0
    %136 = vmatprep.subr.bf16.mxu0 0
    %137 = vmatpush1.bf16.msra.mxu0 %v120
    %138 = vmatprep.subr.bf16.mxu0 0
    %139 = vmatpush2.bf16.msra.mxu0 0
    %140 = vmatprep.subr.bf16.mxu0 0
    %141 = vmatpush2.bf16.msra.mxu0 0
    %142 = vmatprep.subr.bf16.mxu0 0
    %143 = vmatpush2.bf16.msra.mxu0 0
    %144 = vmatprep.subr.bf16.mxu0 0
    %145 = vmatpush2.bf16.msra.mxu0 0
    %146 = vmatprep.subr.bf16.mxu0 0
    %147 = vmatpush2.bf16.msra.mxu0 0
    %148 = vmatprep.subr.bf16.mxu0 0
    %149 = vmatpush2.bf16.msra.mxu0 0
    %150 = vmatprep.subr.bf16.mxu0 0
    %151 = vmatpush2.bf16.msra.mxu0 0
    %152 = vmatprep.subr.bf16.mxu0 0
    %153 = vmatpush2.bf16.msra.mxu0 0
    %154 = vmatprep.mubr.bf16.mxu0 0
    %155 = vmatmul.mubr.bf16.gmra.mxu0 %v116
    %v156 = vpop.f32.mrf.mxu0
    %v157 = vadd.f32 0.0, %v156
    %v158 = vpop.f32.mrf.mxu0
    %v159 = vpop.f32.mrf.mxu0
    %v160 = vpop.f32.mrf.mxu0
    %161 = vdwg.mxu0
    %v162 = vld [vmem:[%s7] sm:$0xff]
    %164 = vset.pattern.permute.xlu0 0
    %165 = vperm.xlu0 %164, %v162
    %v166 = vpop.permute.xlu0 %165
    %v168 = vmul.f32 %v157, %v166
    %v169 = vld [vmem:[%s8] sm:$0xff]
    %171 = vset.pattern.permute.xlu0 0
    %172 = vperm.xlu0 %171, %v169
    %v173 = vpop.permute.xlu0 %172
    %v175 = vadd.f32 %v168, %v173
    %v176 = vmax.f32 %v175, 0.0
    %vm177 = vcmask 3072
    %178 = vst.msk [vmem:[#allocation3] sm:$0xf] %vm177, 0
    %v179 = vpack.c.bf16 %v176, %v176
    %v181 = vunpack.c.l.b16 %v179
    %v182 = vpack.c.b16 %v181, %v181
    %183 = vrot.lane.b32.xlu0 %v182, 1
    %v184 = vpop.permute.xlu0 %183
    %vm186 = vcmask 519176
    %187 = vst.msk [vmem:[#allocation3] sm:$0xf] %vm186, %v184
    %vm188 = vcmask 527872
    %189 = vst.msk [vmem:[#allocation3] sm:$0xf] %vm188, 0
    %vm190 = vcmask 1043976
    %191 = vst.msk [vmem:[#allocation3] sm:$0xf] %vm190, %v184
    %vm192 = vcmask 519168
    %193 = vst.msk [vmem:[#allocation3 + $0x4] sm:$0xf] %vm192, %v179
    %vm194 = vcmask 1043968
    %195 = vst.msk [vmem:[#allocation3 + $0x4] sm:$0xf] %vm194, %v179
    %vm196 = vcmask 519672
    %197 = vst.msk [vmem:[#allocation3 + $0x8] sm:$0xf] %vm196, 0
    %198 = vrot.lane.b32.xlu0 %v182, 127
    %v199 = vpop.permute.xlu0 %198
    %vm201 = vcmask 510976
    %202 = vst.msk [vmem:[#allocation3 + $0x8] sm:$0xf] %vm201, %v199
    %vm203 = vcmask 1044472
    %204 = vst.msk [vmem:[#allocation3 + $0x8] sm:$0xf] %vm203, 0
    %vm205 = vcmask 1035776
    %206 = vst.msk [vmem:[#allocation3 + $0x8] sm:$0xf] %vm205, %v199
    %v207 = vld [vmem:[%s4] sm:$0xf]
    %v208 = vld [vmem:[#allocation3] sm:$0xf]
    %v209 = vld [vmem:[#allocation3 + $0x4] sm:$0xf]
    %v210 = vld [vmem:[#allocation3 + $0x8] sm:$0xf]
    %v211 = vld [vmem:[%s9] sm:$0xff]
    %213 = vset.pattern.permute.xlu0 0
    %214 = vperm.xlu0 %213, %v211
    %v215 = vpop.permute.xlu0 %214
    %v220 = vunpack.c.l.b16 %v208
    %v221 = vunpack.c.l.b16 %v209
    %v222 = vunpack.c.l.b16 %v210
    %v223 = vpack.c.b16 %v221, %v220
    %v224 = vpack.c.b16 %v222, %v222
    %vm226 = vcmask 195584
    %v228 = vsel %vm226, %v207, 0
    %vm230 = vcmask 1043456
    %v232 = vsel %vm230, %v224, 0
    %234 = vmatprep.subr.bf16.mxu0 0
    %235 = vmatpush1.bf16.msra.mxu0 0
    %236 = vmatprep.subr.bf16.mxu0 0
    %237 = vmatpush1.bf16.msra.mxu0 0
    %238 = vmatprep.subr.bf16.mxu0 0
    %239 = vmatpush1.bf16.msra.mxu0 0
    %240 = vmatprep.subr.bf16.mxu0 0
    %241 = vmatpush1.bf16.msra.mxu0 0
    %242 = vmatprep.subr.bf16.mxu0 0
    %243 = vmatpush1.bf16.msra.mxu0 0
    %244 = vmatprep.subr.bf16.mxu0 0
    %245 = vmatpush1.bf16.msra.mxu0 0
    %246 = vmatprep.subr.bf16.mxu0 0
    %247 = vmatpush1.bf16.msra.mxu0 %v232
    %248 = vmatprep.subr.bf16.mxu0 0
    %249 = vmatpush1.bf16.msra.mxu0 %v223
    %250 = vmatprep.subr.bf16.mxu0 0
    %251 = vmatpush2.bf16.msra.mxu0 0
    %252 = vmatprep.subr.bf16.mxu0 0
    %253 = vmatpush2.bf16.msra.mxu0 0
    %254 = vmatprep.subr.bf16.mxu0 0
    %255 = vmatpush2.bf16.msra.mxu0 0
    %256 = vmatprep.subr.bf16.mxu0 0
    %257 = vmatpush2.bf16.msra.mxu0 0
    %258 = vmatprep.subr.bf16.mxu0 0
    %259 = vmatpush2.bf16.msra.mxu0 0
    %260 = vmatprep.subr.bf16.mxu0 0
    %261 = vmatpush2.bf16.msra.mxu0 0
    %262 = vmatprep.subr.bf16.mxu0 0
    %263 = vmatpush2.bf16.msra.mxu0 0
    %264 = vmatprep.subr.bf16.mxu0 0
    %265 = vmatpush2.bf16.msra.mxu0 0
    %266 = vmatprep.mubr.bf16.mxu0 0
    %267 = vmatmul.mubr.bf16.gmra.mxu0 %v228
    %v268 = vpop.f32.mrf.mxu0
    %v269 = vadd.f32 %v215, %v268
    %v270 = vpop.f32.mrf.mxu0
    %v271 = vpop.f32.mrf.mxu0
    %v272 = vpop.f32.mrf.mxu0
    %273 = vdwg.mxu0
    %v274 = vld [vmem:[%s2] sm:$0xff]
    %v275 = vld [vmem:[%s2 + $0x8] sm:$0xff]
    %v276 = vmax.f32 %v274, %v275
    %v277 = vadd.f32 %v269, %v276
    %278 = vst [vmem:[#allocation7] sm:$0xff] %v277
    // Predicated region
    $region46: #{tpu_custom_call.1} parent=1 // pred_check
      _
    $region47: #{tpu_custom_call.1} parent=1 // pred_check_branch
      %280 = sbr.rel (0) target = $region49
    $region48: #{tpu_custom_call.1} parent=1 // pred_region
      %s282 = ssub.s32 128, 128
      %283 = vsyncadd [#allocation6], %s282
      %s285 = sshll.u32 [#allocation7], 4
      %s286 = int_to_ptr.vmem [resolvable:$true] %s285
      %288 = dma.vmem_to_hbm [thread:$0]  %s286, 128, %s10, [#allocation6]
    $region49: #{tpu_custom_call.1} parent=1 // pred_fallthru
      _
    // Predicated region
    $region50: #{tpu_custom_call.1} parent=1 // pred_check
      _
    $region51: #{tpu_custom_call.1} parent=1 // pred_check_branch
      %290 = sbr.rel (0) target = $region53
    $region52: #{tpu_custom_call.1} parent=1 // pred_region
      %291 = dma.done [#allocation6], 128
    $region53: #{tpu_custom_call.1} parent=1 // pred_fallthru
      _
    %292 = vsyncpa [#allocation5], 1
    %293 = vsyncpa [#allocation6], 1

</llo_original>
